<compile_context>
chip_gen: v5e
topology: v5e:2x2
jax: 0.10.0
libtpu: 0.0.40
codegen_flags: <defaults>
</compile_context>

<pallas_src>
import jax
import jax.numpy as jnp
from jax.experimental import pallas as pl
from jax.experimental.pallas import tpu as pltpu


def _mlp_kernel(xt_ref, w1_ref, b1_ref, w2_ref, b2_ref, w3_ref, b3_ref, o_ref):
    # Fused 3-layer MLP, feature-major: h = W @ x + b with batch along lanes.
    xt = xt_ref[...]                                         # (D,  bt) f32

    h1 = jnp.dot(w1_ref[...], xt, preferred_element_type=jnp.float32)
    h1 = jnp.maximum(h1 + b1_ref[...], 0.0)                  # (H1, bt)

    h2 = jnp.dot(w2_ref[...], h1, preferred_element_type=jnp.float32)
    h2 = jnp.maximum(h2 + b2_ref[...], 0.0)                  # (H2, bt)

    out = jnp.dot(w3_ref[...], h2, preferred_element_type=jnp.float32)
    o_ref[...] = (out + b3_ref[0, 0]).astype(o_ref.dtype)    # (1,  bt) lane-dense


def _round_up(n, m):
    return ((n + m - 1) // m) * m


def _choose_batch_tile(batch, input_dim, batch_tile, vmem_budget_bytes=8 << 20):
    """Lane-aligned (multiple of 128) batch tile.

    Large tiles amortize the ~0.35 us per-grid-step overhead, bounded by a
    VMEM budget for the double-buffered x^T tile.  When one tile would cover
    a large batch, split it in two so the 'parallel' grid axis can feed both
    v7x TensorCores.
    """
    full = _round_up(batch, 128)
    # Double-buffered x^T tile must fit the budget: 2 * D * bt * 4 bytes.
    max_bt_vmem = max(128, (vmem_budget_bytes // (2 * 4 * max(input_dim, 1))) // 128 * 128)
    bt = min(_round_up(batch_tile, 128), full, max_bt_vmem)
    if bt >= full and batch > 256:
        bt = min(_round_up((batch + 1) // 2, 128), max_bt_vmem)
    return bt


def quantile_regressor_mlp(x, params, *, batch_tile=1024):
    """Forward pass of QuantileRegressorMLP.

    x       : (B, input_dim) float32
    params  : PyTorch-layout params: w1 (H1,D), b1 (H1,1), w2 (H2,H1),
              b2 (H2,1), w3 (1,H2), b3 (1,1)
    returns : (B,) float32  -- net(x).squeeze(-1)
    """
    B, D = x.shape
    H1 = params["w1"].shape[0]
    H2 = params["w2"].shape[0]

    bt = _choose_batch_tile(B, D, batch_tile)
    B_pad = _round_up(B, bt)
    grid = (B_pad // bt,)

    # Feature-major input: batch along the lane (last) dimension, zero-padded
    # to a multiple of the tile.  Padded columns only produce ReLU(b)-style
    # junk (never NaN) that is sliced off below.
    xt = x.T
    if B_pad != B:
        xt = jnp.pad(xt, ((0, 0), (0, B_pad - B)))

    const = lambda i: (0, 0)  # weights/biases: same full block every grid step

    out2d = pl.pallas_call(
        _mlp_kernel,
        out_shape=jax.ShapeDtypeStruct((1, B_pad), jnp.float32),
        grid_spec=pltpu.PrefetchScalarGridSpec(
            num_scalar_prefetch=0,
            grid=grid,
            in_specs=[
                pl.BlockSpec((D, bt), lambda i: (0, i)),   # x^T tile (lane-dense)
                pl.BlockSpec((H1, D), const),              # w1
                pl.BlockSpec((H1, 1), const),              # b1
                pl.BlockSpec((H2, H1), const),             # w2
                pl.BlockSpec((H2, 1), const),              # b2
                pl.BlockSpec((1, H2), const),              # w3
                pl.BlockSpec(memory_space=pltpu.MemorySpace.SMEM),  # b3 scalar
            ],
            out_specs=pl.BlockSpec((1, bt), lambda i: (0, i)),  # lane-dense out
        ),
        compiler_params=pltpu.CompilerParams(
            dimension_semantics=("parallel",),
        ),
    )(xt, params["w1"], params["b1"], params["w2"], params["b2"],
      params["w3"], params["b3"])

    return out2d[0, :B]  # squeeze(-1) + drop batch padding


def init_params(key, input_dim, hidden_dims=(64, 64)):
    """Deterministic synthetic parameters (PyTorch-like Kaiming-uniform scale),
    stored in PyTorch Linear layout: W (out_features, in_features), b (out, 1)."""
    h1, h2 = hidden_dims
    keys = jax.random.split(key, 6)

    def lin(kw, kb, fan_in, fan_out):
        bound = 1.0 / jnp.sqrt(fan_in)
        w = jax.random.uniform(kw, (fan_out, fan_in), jnp.float32, -bound, bound)
        b = jax.random.uniform(kb, (fan_out, 1), jnp.float32, -bound, bound)
        return w, b

    w1, b1 = lin(keys[0], keys[1], input_dim, h1)
    w2, b2 = lin(keys[2], keys[3], h1, h2)
    w3, b3 = lin(keys[4], keys[5], h2, 1)
    return {"w1": w1, "b1": b1, "w2": w2, "b2": b2, "w3": w3, "b3": b3}


def _reference_forward(x, p):
    h1 = jnp.maximum(x @ p["w1"].T + p["b1"][:, 0], 0.0)
    h2 = jnp.maximum(h1 @ p["w2"].T + p["b2"][:, 0], 0.0)
    return (h2 @ p["w3"].T + p["b3"][:, 0])[:, 0]


if __name__ == "__main__":
    key = jax.random.PRNGKey(0)
    k_x, k_p = jax.random.split(key)

    batch, input_dim = 8, 16
    x = jax.random.normal(k_x, (batch, input_dim), jnp.float32)
    params = init_params(k_p, input_dim, hidden_dims=(64, 64))

    out = quantile_regressor_mlp(x, params)
    out = jax.block_until_ready(out)

    ref = _reference_forward(x, params)
    assert out.shape == (batch,)
    assert jnp.allclose(out, ref, atol=1e-4, rtol=1e-4), float(
        jnp.max(jnp.abs(out - ref)))

    print("KERNEL_OK")
</pallas_src>

<mosaic_0001>
module attributes {stable_mosaic.version = 11 : i64} {
  func.func @_mlp_kernel(%arg0: i32, %arg1: memref<16x128xf32, #tpu.memory_space<vmem>>, %arg2: memref<64x16xf32, #tpu.memory_space<vmem>>, %arg3: memref<64x1xf32, #tpu.memory_space<vmem>>, %arg4: memref<64x64xf32, #tpu.memory_space<vmem>>, %arg5: memref<64x1xf32, #tpu.memory_space<vmem>>, %arg6: memref<1x64xf32, #tpu.memory_space<vmem>>, %arg7: memref<1x1xf32, #tpu.memory_space<smem>>, %arg8: memref<1x128xf32, #tpu.memory_space<vmem>>) attributes {dimension_semantics = [#tpu.dimension_semantics<parallel>], iteration_bounds = array<i64: 1>, scalar_prefetch = 0 : i64, scratch_operands = 0 : i64, tpu.core_type = #tpu.core_type<tc>, window_params = [{transform_indices = @transform_0, window_bounds = array<i64: 16, 128>}, {pipeline_mode = #tpu.pipeline_mode<synchronous>, transform_indices = @transform_1, window_bounds = array<i64: 64, 16>}, {pipeline_mode = #tpu.pipeline_mode<synchronous>, transform_indices = @transform_2, window_bounds = array<i64: 64, 1>}, {pipeline_mode = #tpu.pipeline_mode<synchronous>, transform_indices = @transform_3, window_bounds = array<i64: 64, 64>}, {pipeline_mode = #tpu.pipeline_mode<synchronous>, transform_indices = @transform_4, window_bounds = array<i64: 64, 1>}, {pipeline_mode = #tpu.pipeline_mode<synchronous>, transform_indices = @transform_5, window_bounds = array<i64: 1, 64>}, {transform_indices = @transform_6, window_bounds = array<i64: 1, 1>}, {transform_indices = @transform_7, window_bounds = array<i64: 1, 128>}]} {
    %c0 = arith.constant 0 : index
    %c0_0 = arith.constant 0 : index
    %0 = vector.load %arg1[%c0, %c0_0] : memref<16x128xf32, #tpu.memory_space<vmem>>, vector<16x128xf32>
    %c0_1 = arith.constant 0 : index
    %c0_2 = arith.constant 0 : index
    %1 = vector.load %arg2[%c0_1, %c0_2] : memref<64x16xf32, #tpu.memory_space<vmem>>, vector<64x16xf32>
    %cst = arith.constant dense<0.000000e+00> : vector<64x128xf32>
    %2 = tpu.matmul %1, %0, %cst {dimension_numbers = #tpu.dot_dimension_numbers<[1], [0], [0], [1], [0, 0, 1, 1], [], []>} : vector<64x16xf32>, vector<16x128xf32>, vector<64x128xf32> -> vector<64x128xf32>
    %c0_3 = arith.constant 0 : index
    %c0_4 = arith.constant 0 : index
    %3 = vector.load %arg3[%c0_3, %c0_4] : memref<64x1xf32, #tpu.memory_space<vmem>>, vector<64x1xf32>
    %4 = vector.broadcast %3 : vector<64x1xf32> to vector<64x128xf32>
    %5 = arith.addf %2, %4 : vector<64x128xf32>
    %cst_5 = arith.constant 0.000000e+00 : f32
    %6 = vector.broadcast %cst_5 : f32 to vector<64x128xf32>
    %7 = arith.maximumf %5, %6 : vector<64x128xf32>
    %c0_6 = arith.constant 0 : index
    %c0_7 = arith.constant 0 : index
    %8 = vector.load %arg4[%c0_6, %c0_7] : memref<64x64xf32, #tpu.memory_space<vmem>>, vector<64x64xf32>
    %cst_8 = arith.constant dense<0.000000e+00> : vector<64x128xf32>
    %9 = tpu.matmul %8, %7, %cst_8 {dimension_numbers = #tpu.dot_dimension_numbers<[1], [0], [0], [1], [0, 0, 1, 1], [], []>} : vector<64x64xf32>, vector<64x128xf32>, vector<64x128xf32> -> vector<64x128xf32>
    %c0_9 = arith.constant 0 : index
    %c0_10 = arith.constant 0 : index
    %10 = vector.load %arg5[%c0_9, %c0_10] : memref<64x1xf32, #tpu.memory_space<vmem>>, vector<64x1xf32>
    %11 = vector.broadcast %10 : vector<64x1xf32> to vector<64x128xf32>
    %12 = arith.addf %9, %11 : vector<64x128xf32>
    %cst_11 = arith.constant 0.000000e+00 : f32
    %13 = vector.broadcast %cst_11 : f32 to vector<64x128xf32>
    %14 = arith.maximumf %12, %13 : vector<64x128xf32>
    %c0_12 = arith.constant 0 : index
    %c0_13 = arith.constant 0 : index
    %15 = vector.load %arg6[%c0_12, %c0_13] : memref<1x64xf32, #tpu.memory_space<vmem>>, vector<1x64xf32>
    %cst_14 = arith.constant dense<0.000000e+00> : vector<1x128xf32>
    %16 = tpu.matmul %15, %14, %cst_14 {dimension_numbers = #tpu.dot_dimension_numbers<[1], [0], [0], [1], [0, 0, 1, 1], [], []>} : vector<1x64xf32>, vector<64x128xf32>, vector<1x128xf32> -> vector<1x128xf32>
    %c0_15 = arith.constant 0 : index
    %c0_16 = arith.constant 0 : index
    %17 = memref.load %arg7[%c0_15, %c0_16] : memref<1x1xf32, #tpu.memory_space<smem>>
    %18 = vector.broadcast %17 : f32 to vector<1x128xf32>
    %19 = arith.addf %16, %18 : vector<1x128xf32>
    %c0_17 = arith.constant 0 : index
    %c0_18 = arith.constant 0 : index
    %20 = vector.load %arg8[%c0_17, %c0_18] : memref<1x128xf32, #tpu.memory_space<vmem>>, vector<1x128xf32>
    tpu.vector_store %arg8[%c0_17, %c0_18], %19 {strides = array<i32>} : memref<1x128xf32, #tpu.memory_space<vmem>>, vector<1x128xf32>,
    return
  }
  func.func @transform_0(%arg0: i32) -> (i32, i32) {
    %c0_i32 = arith.constant 0 : i32
    %c0_i32_0 = arith.constant 0 : i32
    return %c0_i32, %arg0 : i32, i32
  }
  func.func @transform_1(%arg0: i32) -> (i32, i32) {
    %c0_i32 = arith.constant 0 : i32
    %c0_i32_0 = arith.constant 0 : i32
    %c0_i32_1 = arith.constant 0 : i32
    return %c0_i32, %c0_i32_0 : i32, i32
  }
  func.func @transform_2(%arg0: i32) -> (i32, i32) {
    %c0_i32 = arith.constant 0 : i32
    %c0_i32_0 = arith.constant 0 : i32
    %c0_i32_1 = arith.constant 0 : i32
    return %c0_i32, %c0_i32_0 : i32, i32
  }
  func.func @transform_3(%arg0: i32) -> (i32, i32) {
    %c0_i32 = arith.constant 0 : i32
    %c0_i32_0 = arith.constant 0 : i32
    %c0_i32_1 = arith.constant 0 : i32
    return %c0_i32, %c0_i32_0 : i32, i32
  }
  func.func @transform_4(%arg0: i32) -> (i32, i32) {
    %c0_i32 = arith.constant 0 : i32
    %c0_i32_0 = arith.constant 0 : i32
    %c0_i32_1 = arith.constant 0 : i32
    return %c0_i32, %c0_i32_0 : i32, i32
  }
  func.func @transform_5(%arg0: i32) -> (i32, i32) {
    %c0_i32 = arith.constant 0 : i32
    %c0_i32_0 = arith.constant 0 : i32
    %c0_i32_1 = arith.constant 0 : i32
    return %c0_i32, %c0_i32_0 : i32, i32
  }
  func.func @transform_6(%arg0: i32) -> (i32, i32) {
    %c0_i32 = arith.constant 0 : i32
    %c0_i32_0 = arith.constant 0 : i32
    %c0_i32_1 = arith.constant 0 : i32
    return %c0_i32, %c0_i32_0 : i32, i32
  }
  func.func @transform_7(%arg0: i32) -> (i32, i32) {
    %c0_i32 = arith.constant 0 : i32
    %c0_i32_0 = arith.constant 0 : i32
    return %c0_i32, %arg0 : i32, i32
  }
}

</mosaic_0001>

<llo_original>
// kernel: tpu_custom_call.1
$region0: #{tpu_custom_call.1}
  #allocation0 [shape = 'u32[]', space=smem, size = 0x4, offset = 0x4, fixed_abs, tag = 'smem constant byte address 0x4 - core index']
  #allocation1 [shape = 'u32[72,128]{1,0:T(1,128)}', space=vmem, size = 0x9000, scoped, tag = 'internal scratch']
  #allocation2 [shape = 'f32[1,1]{1,0:T(1,128)S(6)}', space=smem, size = 0x200, scoped, tag = 'scoped memory for tpu_custom_call.1']
  %s0 = inlined_call_operand.vmem [shape: f32[16,128], index: 0, kind: input, shape index: {}]
  %s1 = inlined_call_operand.vmem [shape: f32[64,16], index: 1, kind: input, shape index: {}]
  %s2 = inlined_call_operand.vmem [shape: f32[64,1], index: 2, kind: input, shape index: {}]
  %s3 = inlined_call_operand.vmem [shape: f32[64,64], index: 3, kind: input, shape index: {}]
  %s4 = inlined_call_operand.vmem [shape: f32[64,1], index: 4, kind: input, shape index: {}]
  %s5 = inlined_call_operand.vmem [shape: f32[1,64], index: 5, kind: input, shape index: {}]
  %s6 = inlined_call_operand.<no memory space> [shape: f32[1,1], index: 6, kind: input, shape index: {}]
  %s7 = inlined_call_operand.hbm [shape: f32[1,128], index: 7, kind: output, shape index: {}]
  %s8 = sld [smem:[#allocation0]]
  $region38: #{tpu_custom_call.1} parent=0
    _
  %s10 = ssub.s32 1, %s8
  %s11 = scalar_select 0, %s10, %s8
  %12 = sst [smem:[#allocation2]] %s6
  $region1: #{tpu_custom_call.1} parent=0
    #allocation3 [shape = 'u8[512]{0}', space=vmem, size = 0x400, scoped, tag = 'output window, operand 0, single buffered']
    #allocation4 [shape = 's32[1]{0}', space=sflag, size = 0x4, scoped, tag = 'scoped memory for tpu_custom_call.1']
    %13 = vsyncpa [#allocation4], 0
    // Predicated region
    $region2: #{tpu_custom_call.1} parent=1 // pred_check
      _
    $region3: #{tpu_custom_call.1} parent=1 // pred_check_branch
      %15 = sbr.rel (0) target = $region5
    $region4: #{tpu_custom_call.1} parent=1 // pred_region
      _
    $region5: #{tpu_custom_call.1} parent=1 // pred_fallthru
      _
    // Predicated region
    $region6: #{tpu_custom_call.1} parent=1 // pred_check
      _
    $region7: #{tpu_custom_call.1} parent=1 // pred_check_branch
      %17 = sbr.rel (0) target = $region9
    $region8: #{tpu_custom_call.1} parent=1 // pred_region
      _
    $region9: #{tpu_custom_call.1} parent=1 // pred_fallthru
      _
    // Predicated region
    $region10: #{tpu_custom_call.1} parent=1 // pred_check
      _
    $region11: #{tpu_custom_call.1} parent=1 // pred_check_branch
      %19 = sbr.rel (0) target = $region13
    $region12: #{tpu_custom_call.1} parent=1 // pred_region
      _
    $region13: #{tpu_custom_call.1} parent=1 // pred_fallthru
      _
    // Predicated region
    $region14: #{tpu_custom_call.1} parent=1 // pred_check
      _
    $region15: #{tpu_custom_call.1} parent=1 // pred_check_branch
      %21 = sbr.rel (0) target = $region17
    $region16: #{tpu_custom_call.1} parent=1 // pred_region
      _
    $region17: #{tpu_custom_call.1} parent=1 // pred_fallthru
      _
    // Predicated region
    $region18: #{tpu_custom_call.1} parent=1 // pred_check
      _
    $region19: #{tpu_custom_call.1} parent=1 // pred_check_branch
      %23 = sbr.rel (0) target = $region21
    $region20: #{tpu_custom_call.1} parent=1 // pred_region
      _
    $region21: #{tpu_custom_call.1} parent=1 // pred_fallthru
      _
    // Predicated region
    $region22: #{tpu_custom_call.1} parent=1 // pred_check
      _
    $region23: #{tpu_custom_call.1} parent=1 // pred_check_branch
      %25 = sbr.rel (0) target = $region25
    $region24: #{tpu_custom_call.1} parent=1 // pred_region
      _
    $region25: #{tpu_custom_call.1} parent=1 // pred_fallthru
      _
    // Predicated region
    $region26: #{tpu_custom_call.1} parent=1 // pred_check
      _
    $region27: #{tpu_custom_call.1} parent=1 // pred_check_branch
      %27 = sbr.rel (0) target = $region29
    $region28: #{tpu_custom_call.1} parent=1 // pred_region
      _
    $region29: #{tpu_custom_call.1} parent=1 // pred_fallthru
      _
    %v28 = vld [vmem:[%s0] sm:$0xff]
    %v29 = vld [vmem:[%s0 + $0x8] sm:$0xff]
    %v30 = vld [vmem:[%s1] sm:$0xff]
    %v31 = vld [vmem:[%s1 + $0x8] sm:$0xff]
    %v32 = vld [vmem:[%s1 + $0x10] sm:$0xff]
    %v33 = vld [vmem:[%s1 + $0x18] sm:$0xff]
    %v34 = vld [vmem:[%s1 + $0x20] sm:$0xff]
    %v35 = vld [vmem:[%s1 + $0x28] sm:$0xff]
    %v36 = vld [vmem:[%s1 + $0x30] sm:$0xff]
    %v37 = vld [vmem:[%s1 + $0x38] sm:$0xff]
    %v38 = vld [vmem:[%s2] sm:$0xff]
    %v39 = vld [vmem:[%s2 + $0x8] sm:$0xff]
    %v40 = vld [vmem:[%s2 + $0x10] sm:$0xff]
    %v41 = vld [vmem:[%s2 + $0x18] sm:$0xff]
    %v42 = vld [vmem:[%s2 + $0x20] sm:$0xff]
    %v43 = vld [vmem:[%s2 + $0x28] sm:$0xff]
    %v44 = vld [vmem:[%s2 + $0x30] sm:$0xff]
    %v45 = vld [vmem:[%s2 + $0x38] sm:$0xff]
    %47 = vset.pattern.permute.xlu0 0
    %48 = vperm.xlu0 %47, %v38
    %v49 = vpop.permute.xlu0 %48
    %52 = vset.pattern.permute.xlu0 0
    %53 = vperm.xlu0 %52, %v39
    %v54 = vpop.permute.xlu0 %53
    %57 = vset.pattern.permute.xlu0 0
    %58 = vperm.xlu0 %57, %v40
    %v59 = vpop.permute.xlu0 %58
    %62 = vset.pattern.permute.xlu0 0
    %63 = vperm.xlu0 %62, %v41
    %v64 = vpop.permute.xlu0 %63
    %67 = vset.pattern.permute.xlu0 0
    %68 = vperm.xlu0 %67, %v42
    %v69 = vpop.permute.xlu0 %68
    %72 = vset.pattern.permute.xlu0 0
    %73 = vperm.xlu0 %72, %v43
    %v74 = vpop.permute.xlu0 %73
    %77 = vset.pattern.permute.xlu0 0
    %78 = vperm.xlu0 %77, %v44
    %v79 = vpop.permute.xlu0 %78
    %82 = vset.pattern.permute.xlu0 0
    %83 = vperm.xlu0 %82, %v45
    %v84 = vpop.permute.xlu0 %83
    %vm86 = vcmask 130048
    %v88 = vsel %vm86, %v30, 0
    %v91 = vsel %vm86, %v31, 0
    %v94 = vsel %vm86, %v32, 0
    %v97 = vsel %vm86, %v33, 0
    %v100 = vsel %vm86, %v34, 0
    %v103 = vsel %vm86, %v35, 0
    %v106 = vsel %vm86, %v36, 0
    %v109 = vsel %vm86, %v37, 0
    %111 = vmatpush.msra.mxu0 0.0
    %112 = vmatpush.msra.mxu0 0.0
    %113 = vmatpush.msra.mxu0 0.0
    %114 = vmatpush.msra.mxu0 0.0
    %115 = vmatpush.msra.mxu0 0.0
    %116 = vmatpush.msra.mxu0 0.0
    %117 = vmatpush.msra.mxu0 0.0
    %118 = vmatpush.msra.mxu0 0.0
    %119 = vmatpush.msra.mxu0 0.0
    %120 = vmatpush.msra.mxu0 0.0
    %121 = vmatpush.msra.mxu0 0.0
    %122 = vmatpush.msra.mxu0 0.0
    %123 = vmatpush.msra.mxu0 0.0
    %124 = vmatpush.msra.mxu0 0.0
    %125 = vmatpush.msra.mxu0 %v29
    %126 = vmatpush.msra.mxu0 %v28
    %127 = vmatmul.f32.gmra.mxu0 %v88
    %v128 = vpop.f32.mrf.mxu0
    %v129 = vadd.f32 %v49, %v128
    %130 = vmatmul.f32.gmra.mxu0 %v91
    %v131 = vpop.f32.mrf.mxu0
    %v132 = vadd.f32 %v54, %v131
    %133 = vmatmul.f32.gmra.mxu0 %v94
    %v134 = vpop.f32.mrf.mxu0
    %v135 = vadd.f32 %v59, %v134
    %136 = vmatmul.f32.gmra.mxu0 %v97
    %v137 = vpop.f32.mrf.mxu0
    %v138 = vadd.f32 %v64, %v137
    %139 = vmatmul.f32.gmra.mxu0 %v100
    %v140 = vpop.f32.mrf.mxu0
    %v141 = vadd.f32 %v69, %v140
    %142 = vmatmul.f32.gmra.mxu0 %v103
    %v143 = vpop.f32.mrf.mxu0
    %v144 = vadd.f32 %v74, %v143
    %145 = vmatmul.f32.gmra.mxu0 %v106
    %v146 = vpop.f32.mrf.mxu0
    %v147 = vadd.f32 %v79, %v146
    %148 = vmatmul.f32.gmra.mxu0 %v109
    %v149 = vpop.f32.mrf.mxu0
    %v150 = vadd.f32 %v84, %v149
    %151 = vdwg.mxu0
    %v152 = vmax.f32 %v129, 0.0
    %v153 = vmax.f32 %v132, 0.0
    %v154 = vmax.f32 %v135, 0.0
    %v155 = vmax.f32 %v138, 0.0
    %v156 = vmax.f32 %v141, 0.0
    %v157 = vmax.f32 %v144, 0.0
    %v158 = vmax.f32 %v147, 0.0
    %v159 = vmax.f32 %v150, 0.0
    %v160 = vld [vmem:[%s3] sm:$0xff]
    %v161 = vld [vmem:[%s3 + $0x8] sm:$0xff]
    %v162 = vld [vmem:[%s3 + $0x10] sm:$0xff]
    %v163 = vld [vmem:[%s3 + $0x18] sm:$0xff]
    %v164 = vld [vmem:[%s3 + $0x20] sm:$0xff]
    %v165 = vld [vmem:[%s3 + $0x28] sm:$0xff]
    %v166 = vld [vmem:[%s3 + $0x30] sm:$0xff]
    %v167 = vld [vmem:[%s3 + $0x38] sm:$0xff]
    %v168 = vld [vmem:[%s4] sm:$0xff]
    %v169 = vld [vmem:[%s4 + $0x8] sm:$0xff]
    %v170 = vld [vmem:[%s4 + $0x10] sm:$0xff]
    %v171 = vld [vmem:[%s4 + $0x18] sm:$0xff]
    %v172 = vld [vmem:[%s4 + $0x20] sm:$0xff]
    %v173 = vld [vmem:[%s4 + $0x28] sm:$0xff]
    %v174 = vld [vmem:[%s4 + $0x30] sm:$0xff]
    %v175 = vld [vmem:[%s4 + $0x38] sm:$0xff]
    %177 = vset.pattern.permute.xlu0 0
    %178 = vperm.xlu0 %177, %v168
    %v179 = vpop.permute.xlu0 %178
    %182 = vset.pattern.permute.xlu0 0
    %183 = vperm.xlu0 %182, %v169
    %v184 = vpop.permute.xlu0 %183
    %187 = vset.pattern.permute.xlu0 0
    %188 = vperm.xlu0 %187, %v170
    %v189 = vpop.permute.xlu0 %188
    %192 = vset.pattern.permute.xlu0 0
    %193 = vperm.xlu0 %192, %v171
    %v194 = vpop.permute.xlu0 %193
    %197 = vset.pattern.permute.xlu0 0
    %198 = vperm.xlu0 %197, %v172
    %v199 = vpop.permute.xlu0 %198
    %202 = vset.pattern.permute.xlu0 0
    %203 = vperm.xlu0 %202, %v173
    %v204 = vpop.permute.xlu0 %203
    %207 = vset.pattern.permute.xlu0 0
    %208 = vperm.xlu0 %207, %v174
    %v209 = vpop.permute.xlu0 %208
    %212 = vset.pattern.permute.xlu0 0
    %213 = vperm.xlu0 %212, %v175
    %v214 = vpop.permute.xlu0 %213
    %vm216 = vcmask 523264
    %v218 = vsel %vm216, %v160, 0
    %v221 = vsel %vm216, %v161, 0
    %v224 = vsel %vm216, %v162, 0
    %v227 = vsel %vm216, %v163, 0
    %v230 = vsel %vm216, %v164, 0
    %v233 = vsel %vm216, %v165, 0
    %v236 = vsel %vm216, %v166, 0
    %v239 = vsel %vm216, %v167, 0
    %241 = vmatpush.msra.mxu0 0.0
    %242 = vmatpush.msra.mxu0 0.0
    %243 = vmatpush.msra.mxu0 0.0
    %244 = vmatpush.msra.mxu0 0.0
    %245 = vmatpush.msra.mxu0 0.0
    %246 = vmatpush.msra.mxu0 0.0
    %247 = vmatpush.msra.mxu0 0.0
    %248 = vmatpush.msra.mxu0 0.0
    %249 = vmatpush.msra.mxu0 %v159
    %250 = vmatpush.msra.mxu0 %v158
    %251 = vmatpush.msra.mxu0 %v157
    %252 = vmatpush.msra.mxu0 %v156
    %253 = vmatpush.msra.mxu0 %v155
    %254 = vmatpush.msra.mxu0 %v154
    %255 = vmatpush.msra.mxu0 %v153
    %256 = vmatpush.msra.mxu0 %v152
    %257 = vmatmul.f32.gmra.mxu0 %v218
    %v258 = vpop.f32.mrf.mxu0
    %v259 = vadd.f32 %v179, %v258
    %260 = vmatmul.f32.gmra.mxu0 %v221
    %v261 = vpop.f32.mrf.mxu0
    %v262 = vadd.f32 %v184, %v261
    %263 = vmatmul.f32.gmra.mxu0 %v224
    %v264 = vpop.f32.mrf.mxu0
    %v265 = vadd.f32 %v189, %v264
    %266 = vmatmul.f32.gmra.mxu0 %v227
    %v267 = vpop.f32.mrf.mxu0
    %v268 = vadd.f32 %v194, %v267
    %269 = vmatmul.f32.gmra.mxu0 %v230
    %v270 = vpop.f32.mrf.mxu0
    %v271 = vadd.f32 %v199, %v270
    %272 = vmatmul.f32.gmra.mxu0 %v233
    %v273 = vpop.f32.mrf.mxu0
    %v274 = vadd.f32 %v204, %v273
    %275 = vmatmul.f32.gmra.mxu0 %v236
    %v276 = vpop.f32.mrf.mxu0
    %v277 = vadd.f32 %v209, %v276
    %278 = vmatmul.f32.gmra.mxu0 %v239
    %v279 = vpop.f32.mrf.mxu0
    %v280 = vadd.f32 %v214, %v279
    %281 = vdwg.mxu0
    %v282 = vmax.f32 %v259, 0.0
    %v283 = vmax.f32 %v262, 0.0
    %v284 = vmax.f32 %v265, 0.0
    %v285 = vmax.f32 %v268, 0.0
    %v286 = vmax.f32 %v271, 0.0
    %v287 = vmax.f32 %v274, 0.0
    %v288 = vmax.f32 %v277, 0.0
    %v289 = vmax.f32 %v280, 0.0
    %v290 = vld [vmem:[%s5] sm:$0x1]
    %s291 = sld [smem:[#allocation2]]
    %v292 = vstv %s291
    %v294 = vsel %vm216, %v290, 0
    %296 = vmatpush.msra.mxu0 0.0
    %297 = vmatpush.msra.mxu0 0.0
    %298 = vmatpush.msra.mxu0 0.0
    %299 = vmatpush.msra.mxu0 0.0
    %300 = vmatpush.msra.mxu0 0.0
    %301 = vmatpush.msra.mxu0 0.0
    %302 = vmatpush.msra.mxu0 0.0
    %303 = vmatpush.msra.mxu0 0.0
    %304 = vmatpush.msra.mxu0 %v289
    %305 = vmatpush.msra.mxu0 %v288
    %306 = vmatpush.msra.mxu0 %v287
    %307 = vmatpush.msra.mxu0 %v286
    %308 = vmatpush.msra.mxu0 %v285
    %309 = vmatpush.msra.mxu0 %v284
    %310 = vmatpush.msra.mxu0 %v283
    %311 = vmatpush.msra.mxu0 %v282
    %312 = vmatmul.f32.gmra.mxu0 %v294
    %v313 = vpop.f32.mrf.mxu0
    %v314 = vadd.f32 %v292, %v313
    %315 = vdwg.mxu0
    %316 = vst [vmem:[#allocation3] sm:$0x1] %v314
    // Predicated region
    $region30: #{tpu_custom_call.1} parent=1 // pred_check
      _
    $region31: #{tpu_custom_call.1} parent=1 // pred_check_branch
      %318 = sbr.rel (0) target = $region33
    $region32: #{tpu_custom_call.1} parent=1 // pred_region
      %320 = vsyncadd [#allocation4], 0
      %s322 = sshll.u32 [#allocation3], 4
      %s323 = int_to_ptr.vmem [resolvable:$true] %s322
      %s324 = sshll.u32 %s7, 4
      %s325 = int_to_ptr.hbm [resolvable:$true] %s324
      %327 = dma.vmem_to_hbm [thread:$0]  %s323, 16, %s325, [#allocation4]
    $region33: #{tpu_custom_call.1} parent=1 // pred_fallthru
      _
    // Predicated region
    $region34: #{tpu_custom_call.1} parent=1 // pred_check
      _
    $region35: #{tpu_custom_call.1} parent=1 // pred_check_branch
      %329 = sbr.rel (0) target = $region37
    $region36: #{tpu_custom_call.1} parent=1 // pred_region
      %331 = dma.done [#allocation4], 16
    $region37: #{tpu_custom_call.1} parent=1 // pred_fallthru
      _
    %332 = vsyncpa [#allocation4], 1

</llo_original>
